<compile_context>
chip_gen: v7x
topology: tpu7x:2x2x1
jax: 0.10.0
libtpu: 0.0.40
codegen_flags: <defaults>
</compile_context>

<pallas_src>
import math
import numpy as np
import jax
import jax.numpy as jnp
from jax import lax
from jax.experimental import pallas as pl
from jax.experimental.pallas import tpu as pltpu


def _round_up(x, m):
    return (x + m - 1) // m * m


def _make_fc_kernel(use_relu: bool, dropout_r: float, tm: int, tn: int,
                    with_acc: bool):
    """Builds the kernel body with compile-time flags baked in.

    with_acc: use a separate f32 VMEM accumulator (needed when the output
    dtype is narrower than f32).  Otherwise the output block itself (resident
    across the K grid axis) is the accumulator.
    """
    drop = float(dropout_r) > 0.0
    if drop:
        # keep iff hash_bits >= threshold  (P(drop) = threshold / 2^32)
        thresh = np.uint32(
            min(int(round(float(dropout_r) * 4294967296.0)), 4294967295))
        scale = np.float32(1.0 / (1.0 - float(dropout_r)))

    def fc_kernel(*refs):
        idx = 0
        if drop:
            seed_ref = refs[idx]
            idx += 1
        x_ref, w_ref, b_ref, o_ref = refs[idx:idx + 4]
        acc_ref = refs[idx + 4] if with_acc else o_ref

        # Grid coordinates read at top level (NOT inside pl.when bodies):
        # program_id inside a cond sub-jaxpr has no interpret lowering.
        i = pl.program_id(0)
        j = pl.program_id(1)
        k = pl.program_id(2)
        nk = pl.num_programs(2)
        if drop:
            seed = seed_ref[0].astype(jnp.uint32)

        @pl.when(k == 0)
        def _():
            acc_ref[...] = jnp.zeros_like(acc_ref)

        # MXU matmul, f32 accumulation.
        acc_ref[...] += jnp.dot(
            x_ref[...], w_ref[...], preferred_element_type=jnp.float32)

        @pl.when(k == nk - 1)
        def _():
            y = acc_ref[...].astype(jnp.float32) + b_ref[...].astype(jnp.float32)
            if use_relu:
                y = jnp.maximum(y, 0.0)
            if drop:
                # Counter-based hash of (global_row, global_col, seed):
                # unique per element regardless of tiling.
                row = (lax.broadcasted_iota(jnp.uint32, (tm, tn), 0)
                       + (i * tm).astype(jnp.uint32))
                col = (lax.broadcasted_iota(jnp.uint32, (tm, tn), 1)
                       + (j * tn).astype(jnp.uint32))
                h = row * jnp.uint32(0x9E3779B1)
                h = h ^ (col * jnp.uint32(0x85EBCA77))
                h = h ^ (seed * jnp.uint32(0xC2B2AE3D))
                # lowbias32 finalizer (pure VPU int ops).
                h = h ^ (h >> 16)
                h = h * jnp.uint32(0x7FEB352D)
                h = h ^ (h >> 15)
                h = h * jnp.uint32(0x846CA68B)
                h = h ^ (h >> 16)
                keep = h >= jnp.uint32(thresh)
                y = jnp.where(keep, y * jnp.float32(scale), 0.0)
            o_ref[...] = y.astype(o_ref.dtype)

    return fc_kernel


def fc_forward(x, w, b, *, use_relu=True, dropout_r=0.0, seed=0,
               compute_dtype=None):
    """y = dropout(relu(x @ w + b)).

    x: (..., in_size); w: (in_size, out_size) (PyTorch weight transposed);
    b: (out_size,).  compute_dtype: optional narrower MXU dtype (e.g.
    jnp.bfloat16) for x/W; accumulation stays f32, output keeps x.dtype.
    """
    in_size, out_size = w.shape
    out_dtype = jnp.dtype(x.dtype)
    lead = x.shape[:-1]
    M = int(np.prod(lead)) if lead else 1
    x2 = x.reshape(M, in_size)

    if compute_dtype is not None:
        x2 = x2.astype(compute_dtype)
        w = w.astype(compute_dtype)
    itemsize = jnp.dtype(x2.dtype).itemsize

    # ---- tile / padding selection --------------------------------------
    # M: sublane-aligned, up to 512.
    tm = min(512, _round_up(max(M, 8), 8))
    Mp = _round_up(M, tm)

    # K: full-extent block when small / not a multiple of 128 (no padding,
    # exempt from the 128 rule); otherwise 128-aligned tiles up to 1024.
    if in_size % 128 == 0 or in_size > 2048:
        Kp = _round_up(in_size, 128)
    else:
        Kp = in_size
    tk = (next(c for c in (1024, 512, 256, 128) if Kp % c == 0)
          if Kp % 128 == 0 else Kp)

    # N: prefer lane-dense tiles; full-extent block for small odd widths.
    if out_size % 128 == 0 or out_size > 512:
        Np = _round_up(out_size, 128)
    else:
        Np = out_size
    tn = (next(c for c in (512, 256, 128) if Np % c == 0)
          if Np % 128 == 0 else Np)
    # v7x megacore: expose >= 2 parallel blocks when M fits in one tile.
    if Mp // tm == 1 and Np // tn < 2 and tn % 256 == 0:
        tn //= 2

    if Mp != M or Kp != in_size:
        x2 = jnp.pad(x2, ((0, Mp - M), (0, Kp - in_size)))
    if Kp != in_size or Np != out_size:
        # TODO(synk): for production, pre-pad/lay out W once at parameter init
        # (static) instead of per call; only hit for large odd K/N.
        w = jnp.pad(w, ((0, Kp - in_size), (0, Np - out_size)))
    b2 = (b if Np == out_size else jnp.pad(b, (0, Np - out_size))).reshape(1, Np)

    drop = float(dropout_r) > 0.0
    with_acc = out_dtype != jnp.dtype(jnp.float32)
    kernel = _make_fc_kernel(bool(use_relu), float(dropout_r), tm, tn, with_acc)
    scratch = [pltpu.VMEM((tm, tn), jnp.float32)] if with_acc else []

    grid = (Mp // tm, Np // tn, Kp // tk)  # K innermost: accumulator resident

    # Truthful HBM-traffic hint: x re-read per N block, W re-read per M block.
    cost = pl.CostEstimate(
        flops=2 * Mp * Np * Kp,
        transcendentals=0,
        bytes_accessed=int((Mp * Kp * (Np // tn) + Kp * Np * (Mp // tm)) * itemsize
                           + Mp * Np * out_dtype.itemsize),
    )

    # Double-buffered inputs + output (+ accumulator); explicit scoped limit
    # sized to the tiles, capped well under v7x's 64 MiB physical VMEM.
    vmem_bytes = (2 * (tm * tk + tk * tn) * itemsize
                  + 2 * tm * tn * out_dtype.itemsize
                  + (tm * tn * 4 if with_acc else 0)
                  + 2 * Np * 4)
    cparams = pltpu.CompilerParams(
        dimension_semantics=("parallel", "parallel", "arbitrary"),
        vmem_limit_bytes=int(min(56 << 20, max(2 * vmem_bytes, 16 << 20))),
    )

    if drop:
        seed_arr = jnp.asarray([seed], dtype=jnp.int32)
        grid_spec = pltpu.PrefetchScalarGridSpec(
            num_scalar_prefetch=1,           # seed lands in SMEM
            grid=grid,
            in_specs=[
                pl.BlockSpec((tm, tk), lambda i, j, k, s: (i, k)),
                pl.BlockSpec((tk, tn), lambda i, j, k, s: (k, j)),
                pl.BlockSpec((1, tn), lambda i, j, k, s: (0, j)),
            ],
            out_specs=pl.BlockSpec((tm, tn), lambda i, j, k, s: (i, j)),
            scratch_shapes=scratch,
        )
        args = (seed_arr, x2, w, b2)
    else:
        grid_spec = pltpu.PrefetchScalarGridSpec(
            num_scalar_prefetch=0,
            grid=grid,
            in_specs=[
                pl.BlockSpec((tm, tk), lambda i, j, k: (i, k)),
                pl.BlockSpec((tk, tn), lambda i, j, k: (k, j)),
                pl.BlockSpec((1, tn), lambda i, j, k: (0, j)),
            ],
            out_specs=pl.BlockSpec((tm, tn), lambda i, j, k: (i, j)),
            scratch_shapes=scratch,
        )
        args = (x2, w, b2)

    out_p = pl.pallas_call(
        kernel,
        out_shape=jax.ShapeDtypeStruct((Mp, Np), out_dtype),
        grid_spec=grid_spec,
        compiler_params=cparams,
        cost_estimate=cost,
    )(*args)

    out2 = out_p[:M, :out_size]
    return out2.reshape(*lead, out_size)


def init_fc_params(key, in_size, out_size, dtype=jnp.float32):
    """Deterministic init mimicking nn.Linear default (uniform +/- 1/sqrt(in))."""
    kw, kb = jax.random.split(key)
    bound = 1.0 / math.sqrt(in_size)
    # Stored as (in_size, out_size) == PyTorch weight transposed.
    w = jax.random.uniform(kw, (in_size, out_size), dtype, -bound, bound)
    b = jax.random.uniform(kb, (out_size,), dtype, -bound, bound)
    return w, b


if __name__ == "__main__":
    key = jax.random.PRNGKey(0)
    k_x, k_p = jax.random.split(key)

    batch, seq, in_size, out_size = 2, 8, 32, 64
    x = jax.random.normal(k_x, (batch, seq, in_size), dtype=jnp.float32)
    w, b = init_fc_params(k_p, in_size, out_size)

    # Main path: FC(in, out, dropout_r=0.0, use_relu=True)
    y = fc_forward(x, w, b, use_relu=True, dropout_r=0.0)
    y = jax.block_until_ready(y)

    # Reference check in plain JAX (linear + relu).
    y_ref = jnp.maximum(x @ w + b, 0.0)
    np.testing.assert_allclose(np.asarray(y), np.asarray(y_ref),
                               rtol=1e-5, atol=1e-5)
    assert y.shape == (batch, seq, out_size)

    # Opt-in bf16 compute path (f32 accumulation); looser tolerance.
    y_bf = fc_forward(x, w, b, use_relu=True, dropout_r=0.0,
                      compute_dtype=jnp.bfloat16)
    y_bf = jax.block_until_ready(y_bf)
    np.testing.assert_allclose(np.asarray(y_bf), np.asarray(y_ref),
                               rtol=5e-2, atol=5e-2)

    # Dropout path (training-mode semantics, fixed seed): every surviving
    # element must equal relu(xW+b) / (1-p); the rest are exactly zero.
    p = 0.1
    y_drop = fc_forward(x, w, b, use_relu=True, dropout_r=p, seed=123)
    y_drop = jax.block_until_ready(y_drop)
    assert y_drop.shape == (batch, seq, out_size)
    yd = np.asarray(y_drop)
    yr = np.asarray(y_ref) / (1.0 - p)
    nz = yd != 0.0
    np.testing.assert_allclose(yd[nz], yr[nz], rtol=1e-5, atol=1e-5)

    print("KERNEL_OK")
</pallas_src>

<mosaic_0001>
module attributes {stable_mosaic.version = 11 : i64} {
  func.func @fc_kernel(%arg0: i32, %arg1: i32, %arg2: i32, %arg3: memref<16x32xf32, #tpu.memory_space<vmem>>, %arg4: memref<32x64xf32, #tpu.memory_space<vmem>>, %arg5: memref<1x64xf32, #tpu.memory_space<vmem>>, %arg6: memref<16x64xf32, #tpu.memory_space<vmem>>) attributes {dimension_semantics = [#tpu.dimension_semantics<parallel>, #tpu.dimension_semantics<parallel>, #tpu.dimension_semantics<arbitrary>], iteration_bounds = array<i64: 1, 1, 1>, scalar_prefetch = 0 : i64, scratch_operands = 0 : i64, tpu.core_type = #tpu.core_type<tc>, window_params = [{transform_indices = @transform_0, window_bounds = array<i64: 16, 32>}, {transform_indices = @transform_1, window_bounds = array<i64: 32, 64>}, {transform_indices = @transform_2, window_bounds = array<i64: 1, 64>}, {transform_indices = @transform_3, window_bounds = array<i64: 16, 64>}]} {
    %c0_i32 = arith.constant 0 : i32
    %0 = arith.cmpi eq, %arg2, %c0_i32 : i32
    %1 = arith.extui %0 : i1 to i32
    %c0_i32_0 = arith.constant 0 : i32
    %2 = arith.cmpi ne, %1, %c0_i32_0 : i32
    scf.if %2 {
      %cst_10 = arith.constant 0.000000e+00 : f32
      %12 = vector.broadcast %cst_10 : f32 to vector<16x64xf32>
      %c0_11 = arith.constant 0 : index
      %c0_12 = arith.constant 0 : index
      %13 = vector.load %arg6[%c0_11, %c0_12] : memref<16x64xf32, #tpu.memory_space<vmem>>, vector<16x64xf32>
      tpu.vector_store %arg6[%c0_11, %c0_12], %12 {strides = array<i32>} : memref<16x64xf32, #tpu.memory_space<vmem>>, vector<16x64xf32>,
    } else {
    }
    %c0 = arith.constant 0 : index
    %c0_1 = arith.constant 0 : index
    %3 = vector.load %arg6[%c0, %c0_1] : memref<16x64xf32, #tpu.memory_space<vmem>>, vector<16x64xf32>
    %c0_2 = arith.constant 0 : index
    %c0_3 = arith.constant 0 : index
    %4 = vector.load %arg3[%c0_2, %c0_3] : memref<16x32xf32, #tpu.memory_space<vmem>>, vector<16x32xf32>
    %c0_4 = arith.constant 0 : index
    %c0_5 = arith.constant 0 : index
    %5 = vector.load %arg4[%c0_4, %c0_5] : memref<32x64xf32, #tpu.memory_space<vmem>>, vector<32x64xf32>
    %cst = arith.constant dense<0.000000e+00> : vector<16x64xf32>
    %6 = tpu.matmul %4, %5, %cst {dimension_numbers = #tpu.dot_dimension_numbers<[1], [0], [0], [1], [0, 0, 1, 1], [], []>} : vector<16x32xf32>, vector<32x64xf32>, vector<16x64xf32> -> vector<16x64xf32>
    %7 = arith.addf %3, %6 : vector<16x64xf32>
    %c0_6 = arith.constant 0 : index
    %c0_7 = arith.constant 0 : index
    %8 = vector.load %arg6[%c0_6, %c0_7] : memref<16x64xf32, #tpu.memory_space<vmem>>, vector<16x64xf32>
    tpu.vector_store %arg6[%c0_6, %c0_7], %7 {strides = array<i32>} : memref<16x64xf32, #tpu.memory_space<vmem>>, vector<16x64xf32>,
    %c0_i32_8 = arith.constant 0 : i32
    %9 = arith.cmpi eq, %arg2, %c0_i32_8 : i32
    %10 = arith.extui %9 : i1 to i32
    %c0_i32_9 = arith.constant 0 : i32
    %11 = arith.cmpi ne, %10, %c0_i32_9 : i32
    scf.if %11 {
      %c0_10 = arith.constant 0 : index
      %c0_11 = arith.constant 0 : index
      %12 = vector.load %arg6[%c0_10, %c0_11] : memref<16x64xf32, #tpu.memory_space<vmem>>, vector<16x64xf32>
      %c0_12 = arith.constant 0 : index
      %c0_13 = arith.constant 0 : index
      %13 = vector.load %arg5[%c0_12, %c0_13] : memref<1x64xf32, #tpu.memory_space<vmem>>, vector<1x64xf32>
      %14 = vector.broadcast %13 : vector<1x64xf32> to vector<16x64xf32>
      %15 = arith.addf %12, %14 : vector<16x64xf32>
      %cst_14 = arith.constant 0.000000e+00 : f32
      %16 = vector.broadcast %cst_14 : f32 to vector<16x64xf32>
      %17 = arith.maximumf %15, %16 : vector<16x64xf32>
      %c0_15 = arith.constant 0 : index
      %c0_16 = arith.constant 0 : index
      %18 = vector.load %arg6[%c0_15, %c0_16] : memref<16x64xf32, #tpu.memory_space<vmem>>, vector<16x64xf32>
      tpu.vector_store %arg6[%c0_15, %c0_16], %17 {strides = array<i32>} : memref<16x64xf32, #tpu.memory_space<vmem>>, vector<16x64xf32>,
    } else {
    }
    return
  }
  func.func @transform_0(%arg0: i32, %arg1: i32, %arg2: i32) -> (i32, i32) {
    %c0_i32 = arith.constant 0 : i32
    return %arg0, %arg2 : i32, i32
  }
  func.func @transform_1(%arg0: i32, %arg1: i32, %arg2: i32) -> (i32, i32) {
    %c0_i32 = arith.constant 0 : i32
    return %arg2, %arg1 : i32, i32
  }
  func.func @transform_2(%arg0: i32, %arg1: i32, %arg2: i32) -> (i32, i32) {
    %c0_i32 = arith.constant 0 : i32
    %c0_i32_0 = arith.constant 0 : i32
    return %c0_i32, %arg1 : i32, i32
  }
  func.func @transform_3(%arg0: i32, %arg1: i32, %arg2: i32) -> (i32, i32) {
    %c0_i32 = arith.constant 0 : i32
    return %arg0, %arg1 : i32, i32
  }
}

</mosaic_0001>

<llo_original>
// kernel: tpu_custom_call.1
$region0: #{tpu_custom_call.1}
  #allocation0 [shape = 'u32[]', space=smem, size = 0x4, offset = 0x4, fixed_abs, tag = 'smem constant byte address 0x4 - core index']
  #allocation1 [shape = 'u32[144,128]{1,0:T(1,128)}', space=vmem, size = 0x12000, scoped, tag = 'internal scratch']
  %s0 = inlined_call_operand.hbm [shape: f32[16,32], index: 0, kind: input, shape index: {}]
  %s1 = inlined_call_operand.hbm [shape: f32[32,64], index: 1, kind: input, shape index: {}]
  %s2 = inlined_call_operand.vmem [shape: f32[1,64], index: 2, kind: input, shape index: {}]
  %s3 = inlined_call_operand.hbm [shape: f32[16,64], index: 3, kind: output, shape index: {}]
  %s4 = sld [smem:[#allocation0]]
  $region38: #{tpu_custom_call.1} parent=0
    _
  %s6 = ssub.s32 1, %s4
  %s7 = scalar_select 0, %s6, %s4
  $region1: #{tpu_custom_call.1} parent=0
    #allocation2 [shape = 'u8[8192]{0}', space=vmem, size = 0x2000, scoped, tag = 'input window, operand 0, single buffered']
    #allocation3 [shape = 's32[1]{0}', space=sflag, size = 0x4, scoped, tag = 'scoped memory for tpu_custom_call.1']
    #allocation4 [shape = 's32[1]{0}', space=sflag, size = 0x4, scoped, tag = 'scoped memory for tpu_custom_call.1']
    #allocation5 [shape = 'u8[16384]{0}', space=vmem, size = 0x4000, scoped, tag = 'input window, operand 1, single buffered']
    #allocation6 [shape = 's32[1]{0}', space=sflag, size = 0x4, scoped, tag = 'scoped memory for tpu_custom_call.1']
    #allocation7 [shape = 'u8[8192]{0}', space=vmem, size = 0x2000, scoped, tag = 'output window, operand 0, single buffered']
    %8 = vsyncpa [#allocation3], 0
    %9 = vsyncpa [#allocation6], 0
    %10 = vsyncpa [#allocation4], 0
    // Predicated region
    $region2: #{tpu_custom_call.1} parent=1 // pred_check
      _
    $region3: #{tpu_custom_call.1} parent=1 // pred_check_branch
      %12 = sbr.rel (0) target = $region5
    $region4: #{tpu_custom_call.1} parent=1 // pred_region
      %s14 = ssub.s32 256, 256
      %15 = vsyncadd [#allocation3], %s14
      %s16 = sshll.u32 [#allocation2], 4
      %s17 = int_to_ptr.vmem [resolvable:$true] %s16
      %22 = dma.hbm_to_vmem [thread:$0]  %s0, 256, %s17, [#allocation3], 128, 128, 8
    $region5: #{tpu_custom_call.1} parent=1 // pred_fallthru
      _
    // Predicated region
    $region6: #{tpu_custom_call.1} parent=1 // pred_check
      _
    $region7: #{tpu_custom_call.1} parent=1 // pred_check_branch
      %24 = sbr.rel (0) target = $region9
    $region8: #{tpu_custom_call.1} parent=1 // pred_region
      %s26 = ssub.s32 512, 512
      %27 = vsyncadd [#allocation6], %s26
      %s28 = sshll.u32 [#allocation5], 4
      %s29 = int_to_ptr.vmem [resolvable:$true] %s28
      %34 = dma.hbm_to_vmem [thread:$0]  %s1, 512, %s29, [#allocation6], 128, 128, 8
    $region9: #{tpu_custom_call.1} parent=1 // pred_fallthru
      _
    // Predicated region
    $region10: #{tpu_custom_call.1} parent=1 // pred_check
      _
    $region11: #{tpu_custom_call.1} parent=1 // pred_check_branch
      %36 = sbr.rel (0) target = $region13
    $region12: #{tpu_custom_call.1} parent=1 // pred_region
      _
    $region13: #{tpu_custom_call.1} parent=1 // pred_fallthru
      _
    // Predicated region
    $region14: #{tpu_custom_call.1} parent=1 // pred_check
      _
    $region15: #{tpu_custom_call.1} parent=1 // pred_check_branch
      %38 = sbr.rel (0) target = $region17
    $region16: #{tpu_custom_call.1} parent=1 // pred_region
      %39 = dma.done [#allocation3], 256
    $region17: #{tpu_custom_call.1} parent=1 // pred_fallthru
      _
    // Predicated region
    $region18: #{tpu_custom_call.1} parent=1 // pred_check
      _
    $region19: #{tpu_custom_call.1} parent=1 // pred_check_branch
      %41 = sbr.rel (0) target = $region21
    $region20: #{tpu_custom_call.1} parent=1 // pred_region
      %42 = dma.done [#allocation6], 512
    $region21: #{tpu_custom_call.1} parent=1 // pred_fallthru
      _
    %p43 = scmp.eq.s32.totalorder 0, 0
    // Predicated region
    $region22: #{tpu_custom_call.1} parent=1 // pred_check
      %p44 = pneg %p43
    $region23: #{tpu_custom_call.1} parent=1 // pred_check_branch
      %46 = sbr.rel (%p44) target = $region25
    $region24: #{tpu_custom_call.1} parent=1 // pred_region
      %vm47 = vcmask 523264
      %48 = vst.msk [vmem:[#allocation7] sm:$0xff] %vm47, 0.0
      %49 = vst.msk [vmem:[#allocation7 + $0x8] sm:$0xff] %vm47, 0.0
    $region25: #{tpu_custom_call.1} parent=1 // pred_fallthru
      _
    %v50 = vld [vmem:[#allocation7] sm:$0xff]
    %v51 = vld [vmem:[#allocation7 + $0x8] sm:$0xff]
    %v52 = vld [vmem:[#allocation2] sm:$0xff]
    %v53 = vld [vmem:[#allocation2 + $0x8] sm:$0xff]
    %v54 = vld [vmem:[#allocation5] sm:$0xff]
    %v55 = vld [vmem:[#allocation5 + $0x8] sm:$0xff]
    %v56 = vld [vmem:[#allocation5 + $0x10] sm:$0xff]
    %v57 = vld [vmem:[#allocation5 + $0x18] sm:$0xff]
    %vm58 = vcmask 261120
    %v60 = vsel %vm58, %v52, 0
    %v63 = vsel %vm58, %v53, 0
    %65 = vmatprep.subr.mxu0 0.0
    %66 = vmatpush1.msra.mxu0 %v54
    %67 = vmatprep.subr.mxu0 0.0
    %68 = vmatpush1.msra.mxu0 %v55
    %69 = vmatprep.subr.mxu0 0.0
    %70 = vmatpush1.msra.mxu0 %v56
    %71 = vmatprep.subr.mxu0 0.0
    %72 = vmatpush1.msra.mxu0 %v57
    %73 = vmatprep.subr.mxu0 0.0
    %74 = vmatpush1.msra.mxu0 0.0
    %75 = vmatprep.subr.mxu0 0.0
    %76 = vmatpush1.msra.mxu0 0.0
    %77 = vmatprep.subr.mxu0 0.0
    %78 = vmatpush1.msra.mxu0 0.0
    %79 = vmatprep.subr.mxu0 0.0
    %80 = vmatpush1.msra.mxu0 0.0
    %81 = vmatprep.subr.mxu0 0.0
    %82 = vmatpush1.msra.mxu0 0.0
    %83 = vmatprep.subr.mxu0 0.0
    %84 = vmatpush1.msra.mxu0 0.0
    %85 = vmatprep.subr.mxu0 0.0
    %86 = vmatpush1.msra.mxu0 0.0
    %87 = vmatprep.subr.mxu0 0.0
    %88 = vmatpush1.msra.mxu0 0.0
    %89 = vmatprep.subr.mxu0 0.0
    %90 = vmatpush1.msra.mxu0 0.0
    %91 = vmatprep.subr.mxu0 0.0
    %92 = vmatpush1.msra.mxu0 0.0
    %93 = vmatprep.subr.mxu0 0.0
    %94 = vmatpush1.msra.mxu0 0.0
    %95 = vmatprep.subr.mxu0 0.0
    %96 = vmatpush1.msra.mxu0 0.0
    %97 = vmatprep.subr.mxu0 0.0
    %98 = vmatpush1.msra.mxu0 0.0
    %99 = vmatprep.subr.mxu0 0.0
    %100 = vmatpush1.msra.mxu0 0.0
    %101 = vmatprep.subr.mxu0 0.0
    %102 = vmatpush1.msra.mxu0 0.0
    %103 = vmatprep.subr.mxu0 0.0
    %104 = vmatpush1.msra.mxu0 0.0
    %105 = vmatprep.subr.mxu0 0.0
    %106 = vmatpush1.msra.mxu0 0.0
    %107 = vmatprep.subr.mxu0 0.0
    %108 = vmatpush1.msra.mxu0 0.0
    %109 = vmatprep.subr.mxu0 0.0
    %110 = vmatpush1.msra.mxu0 0.0
    %111 = vmatprep.subr.mxu0 0.0
    %112 = vmatpush1.msra.mxu0 0.0
    %113 = vmatprep.subr.mxu0 0.0
    %114 = vmatpush1.msra.mxu0 0.0
    %115 = vmatprep.subr.mxu0 0.0
    %116 = vmatpush1.msra.mxu0 0.0
    %117 = vmatprep.subr.mxu0 0.0
    %118 = vmatpush1.msra.mxu0 0.0
    %119 = vmatprep.subr.mxu0 0.0
    %120 = vmatpush1.msra.mxu0 0.0
    %121 = vmatprep.subr.mxu0 0.0
    %122 = vmatpush1.msra.mxu0 0.0
    %123 = vmatprep.subr.mxu0 0.0
    %124 = vmatpush1.msra.mxu0 0.0
    %125 = vmatprep.subr.mxu0 0.0
    %126 = vmatpush1.msra.mxu0 0.0
    %127 = vmatprep.subr.mxu0 0.0
    %128 = vmatpush1.msra.mxu0 0.0
    %129 = vmatprep.mubr.f32.mxu0 0.0
    %130 = vmatmul.mubr.f32.gmra.mrb[0].mxu0 %v60
    %v131 = vpop.f32.mrb[0].mxu0
    %v132 = vadd.f32 0.0, %v131
    %v133 = vpop.f32.mrb[0].mxu0
    %134 = vmatprep.mubr.f32.mxu0 0.0
    %135 = vmatmul.mubr.f32.gmra.mrb[0].mxu0 %v63
    %v136 = vpop.f32.mrb[0].mxu0
    %v137 = vadd.f32 0.0, %v136
    %v138 = vpop.f32.mrb[0].mxu0
    %139 = vdwg.mxu0
    %v140 = vadd.f32 %v50, %v132
    %v141 = vadd.f32 %v51, %v137
    %vm142 = vcmask 523264
    %143 = vst.msk [vmem:[#allocation7] sm:$0xff] %vm142, %v140
    %144 = vst.msk [vmem:[#allocation7 + $0x8] sm:$0xff] %vm142, %v141
    // Predicated region
    $region26: #{tpu_custom_call.1} parent=1 // pred_check
      %p145 = pneg %p43
    $region27: #{tpu_custom_call.1} parent=1 // pred_check_branch
      %147 = sbr.rel (%p145) target = $region29
    $region28: #{tpu_custom_call.1} parent=1 // pred_region
      %v148 = vld [vmem:[#allocation7] sm:$0xff]
      %v149 = vld [vmem:[#allocation7 + $0x8] sm:$0xff]
      %v150 = vld [vmem:[%s2] sm:$0x1]
      %v152 = vlaneseq
      %v153 = vshrl.u32 %v152, 7
      %v154 = vsub.s32 0, %v153
      %v155 = vrot.slane %v150, %v154
      %v157 = vadd.f32 %v148, %v155
      %v158 = vadd.f32 %v149, %v155
      %v159 = vmax.f32 %v157, 0.0
      %v160 = vmax.f32 %v158, 0.0
      %161 = vst.msk [vmem:[#allocation7] sm:$0xff] %vm142, %v159
      %162 = vst.msk [vmem:[#allocation7 + $0x8] sm:$0xff] %vm142, %v160
    $region29: #{tpu_custom_call.1} parent=1 // pred_fallthru
      _
    // Predicated region
    $region30: #{tpu_custom_call.1} parent=1 // pred_check
      _
    $region31: #{tpu_custom_call.1} parent=1 // pred_check_branch
      %164 = sbr.rel (0) target = $region33
    $region32: #{tpu_custom_call.1} parent=1 // pred_region
      %s166 = ssub.s32 256, 256
      %167 = vsyncadd [#allocation4], %s166
      %s168 = sshll.u32 [#allocation7], 4
      %s169 = int_to_ptr.vmem [resolvable:$true] %s168
      %174 = dma.vmem_to_hbm [thread:$0]  %s169, 256, %s3, [#allocation4], 128, 128, 8
    $region33: #{tpu_custom_call.1} parent=1 // pred_fallthru
      _
    // Predicated region
    $region34: #{tpu_custom_call.1} parent=1 // pred_check
      _
    $region35: #{tpu_custom_call.1} parent=1 // pred_check_branch
      %176 = sbr.rel (0) target = $region37
    $region36: #{tpu_custom_call.1} parent=1 // pred_region
      %177 = dma.done [#allocation4], 256
    $region37: #{tpu_custom_call.1} parent=1 // pred_fallthru
      _
    %178 = vsyncpa [#allocation3], 1
    %179 = vsyncpa [#allocation6], 1
    %180 = vsyncpa [#allocation4], 1

</llo_original>
